<compile_context>
chip_gen: v7x
topology: tpu7x:2x2x1
jax: 0.10.0
libtpu: 0.0.40
codegen_flags: <defaults>
</compile_context>

<pallas_src>
import jax
import jax.numpy as jnp
from jax.experimental import pallas as pl
from jax.experimental.pallas import tpu as pltpu

IN_DIM = 784
H1 = 128
H2 = 64
OUT_DIM = 10
OUT_PAD = 128  # lane-dense padded output width


def _round_up(n, m):
    return ((n + m - 1) // m) * m


def mlp_kernel(x_ref, w1_ref, b1_ref, w2_ref, b2_ref, w3_ref, b3_ref, out_ref):
    # Layer 1: bf16 MXU matmul, f32 accumulate; bias + ReLU stay f32 on the VPU.
    # (astype is a no-op when the producer already supplies bf16 x.)
    h = jnp.dot(x_ref[...].astype(jnp.bfloat16), w1_ref[...],
                preferred_element_type=jnp.float32)
    h = jnp.maximum(h + b1_ref[...], 0.0)
    # Layer 2
    h = jnp.dot(h.astype(jnp.bfloat16), w2_ref[...],
                preferred_element_type=jnp.float32)
    h = jnp.maximum(h + b2_ref[...], 0.0)
    # Output layer (logits, no activation) — lane-dense padded to 128 columns.
    o = jnp.dot(h.astype(jnp.bfloat16), w3_ref[...],
                preferred_element_type=jnp.float32)
    out_ref[...] = (o + b3_ref[...]).astype(out_ref.dtype)


def mlp_forward(x, params, *, block_m=1024, out_dtype=jnp.bfloat16,
                padded_output=False):
    """x: [B, 784] (bf16 preferred, f32 accepted). params: [in, out] weights + [1, out] biases.

    Returns [B, 10] logits in `out_dtype`, or the raw padded [B_in, 128] buffer
    when padded_output=True (lets the consumer fuse/skip the slice copy).
    """
    B, F = x.shape
    assert F == IN_DIM

    # Tiny pad only when B < 8 (sublane minimum); no full-batch pad copy.
    B_in = B
    if B < 8:
        x = jnp.pad(x, ((0, 8 - B), (0, 0)))
        B_in = 8

    # Batch tile: multiple of 8, at most block_m rows.
    tm = min(block_m, _round_up(B_in, 8))
    # v7x: aim for >= 2 grid steps so both TensorCores get batch tiles.
    if pl.cdiv(B_in, tm) < 2 and B_in > 8:
        tm = _round_up(pl.cdiv(B_in, 2), 8)
    grid = (pl.cdiv(B_in, tm),)

    # Lane-dense zero-padding of the last layer (10 -> 128 columns); padded
    # logits are exactly 0, so the padded buffer is safe to consume directly.
    w3p = jnp.pad(params["w3"], ((0, 0), (0, OUT_PAD - OUT_DIM)))
    b3p = jnp.pad(params["b3"], ((0, 0), (0, OUT_PAD - OUT_DIM)))

    resident = lambda i: (0, 0)  # weights/biases stay in VMEM across all batch tiles

    flops = 2 * B_in * (IN_DIM * H1 + H1 * H2 + H2 * OUT_PAD)
    bytes_accessed = (
        B_in * IN_DIM * x.dtype.itemsize                        # x in
        + B_in * OUT_PAD * jnp.dtype(out_dtype).itemsize        # out
        + (IN_DIM * H1 + H1 * H2 + H2 * OUT_PAD) * 2            # bf16 weights
        + (H1 + H2 + OUT_PAD) * 4                               # f32 biases
    )

    out_full = pl.pallas_call(
        mlp_kernel,
        out_shape=jax.ShapeDtypeStruct((B_in, OUT_PAD), out_dtype),
        grid=grid,
        in_specs=[
            pl.BlockSpec((tm, IN_DIM), lambda i: (i, 0)),    # x: tiled over batch
            pl.BlockSpec((IN_DIM, H1), resident),            # w1
            pl.BlockSpec((1, H1), resident),                 # b1
            pl.BlockSpec((H1, H2), resident),                # w2
            pl.BlockSpec((1, H2), resident),                 # b2
            pl.BlockSpec((H2, OUT_PAD), resident),           # w3 (padded)
            pl.BlockSpec((1, OUT_PAD), resident),            # b3 (padded)
        ],
        out_specs=pl.BlockSpec((tm, OUT_PAD), lambda i: (i, 0)),
        compiler_params=pltpu.CompilerParams(
            dimension_semantics=("parallel",),
        ),
        cost_estimate=pl.CostEstimate(
            flops=flops, transcendentals=0, bytes_accessed=bytes_accessed),
    )(x, params["w1"], params["b1"], params["w2"], params["b2"], w3p, b3p)

    if padded_output:
        return out_full
    return out_full[:B, :OUT_DIM]


def init_params(key, in_dim=IN_DIM, hidden=(H1, H2), out_dim=OUT_DIM):
    """Init matching PyTorch nn.Linear default U(-1/sqrt(fan_in), +1/sqrt(fan_in)).

    Weights stored transposed to [in, out] (for x @ W) in bf16; biases [1, out] f32.
    """
    dims = [in_dim, *hidden, out_dim]
    params = {}
    for i, (fan_in, fan_out) in enumerate(zip(dims[:-1], dims[1:]), start=1):
        key, kw, kb = jax.random.split(key, 3)
        bound = 1.0 / jnp.sqrt(fan_in)
        params[f"w{i}"] = jax.random.uniform(
            kw, (fan_in, fan_out), jnp.float32, -bound, bound).astype(jnp.bfloat16)
        params[f"b{i}"] = jax.random.uniform(
            kb, (1, fan_out), jnp.float32, -bound, bound)
    return params


def mlp_reference(x, params):
    """Pure-JAX reference with the same precision scheme (bf16 matmul, f32 accumulate)."""
    h = jnp.dot(x.astype(jnp.bfloat16), params["w1"],
                preferred_element_type=jnp.float32)
    h = jnp.maximum(h + params["b1"], 0.0)
    h = jnp.dot(h.astype(jnp.bfloat16), params["w2"],
                preferred_element_type=jnp.float32)
    h = jnp.maximum(h + params["b2"], 0.0)
    o = jnp.dot(h.astype(jnp.bfloat16), params["w3"],
                preferred_element_type=jnp.float32)
    return o + params["b3"]


if __name__ == "__main__":
    key = jax.random.PRNGKey(0)
    kx, kp = jax.random.split(key)
    B = 8
    # Producer supplies bf16 x (halves the dominant HBM read inside the kernel).
    x = jax.random.normal(kx, (B, IN_DIM), jnp.float32).astype(jnp.bfloat16)
    params = init_params(kp)

    out = mlp_forward(x, params)
    jax.block_until_ready(out)

    ref = mlp_reference(x, params)
    assert out.shape == (B, OUT_DIM)
    assert jnp.allclose(out.astype(jnp.float32), ref, atol=2e-2, rtol=2e-2)
    print("KERNEL_OK")
</pallas_src>

<mosaic_0001>
module attributes {stable_mosaic.version = 11 : i64} {
  func.func @mlp_kernel(%arg0: i32, %arg1: memref<8x784xbf16, #tpu.memory_space<vmem>>, %arg2: memref<784x128xbf16, #tpu.memory_space<vmem>>, %arg3: memref<1x128xf32, #tpu.memory_space<vmem>>, %arg4: memref<128x64xbf16, #tpu.memory_space<vmem>>, %arg5: memref<1x64xf32, #tpu.memory_space<vmem>>, %arg6: memref<64x128xbf16, #tpu.memory_space<vmem>>, %arg7: memref<1x128xf32, #tpu.memory_space<vmem>>, %arg8: memref<8x128xbf16, #tpu.memory_space<vmem>>) attributes {dimension_semantics = [#tpu.dimension_semantics<parallel>], iteration_bounds = array<i64: 1>, scalar_prefetch = 0 : i64, scratch_operands = 0 : i64, tpu.core_type = #tpu.core_type<tc>, window_params = [{transform_indices = @transform_0, window_bounds = array<i64: 8, 784>}, {pipeline_mode = #tpu.pipeline_mode<synchronous>, transform_indices = @transform_1, window_bounds = array<i64: 784, 128>}, {pipeline_mode = #tpu.pipeline_mode<synchronous>, transform_indices = @transform_2, window_bounds = array<i64: 1, 128>}, {pipeline_mode = #tpu.pipeline_mode<synchronous>, transform_indices = @transform_3, window_bounds = array<i64: 128, 64>}, {pipeline_mode = #tpu.pipeline_mode<synchronous>, transform_indices = @transform_4, window_bounds = array<i64: 1, 64>}, {pipeline_mode = #tpu.pipeline_mode<synchronous>, transform_indices = @transform_5, window_bounds = array<i64: 64, 128>}, {pipeline_mode = #tpu.pipeline_mode<synchronous>, transform_indices = @transform_6, window_bounds = array<i64: 1, 128>}, {transform_indices = @transform_7, window_bounds = array<i64: 8, 128>}]} {
    %c0 = arith.constant 0 : index
    %c0_0 = arith.constant 0 : index
    %0 = vector.load %arg1[%c0, %c0_0] : memref<8x784xbf16, #tpu.memory_space<vmem>>, vector<8x784xbf16>
    %c0_1 = arith.constant 0 : index
    %c0_2 = arith.constant 0 : index
    %1 = vector.load %arg2[%c0_1, %c0_2] : memref<784x128xbf16, #tpu.memory_space<vmem>>, vector<784x128xbf16>
    %cst = arith.constant dense<0.000000e+00> : vector<8x128xf32>
    %2 = tpu.matmul %0, %1, %cst {dimension_numbers = #tpu.dot_dimension_numbers<[1], [0], [0], [1], [0, 0, 1, 1], [], []>} : vector<8x784xbf16>, vector<784x128xbf16>, vector<8x128xf32> -> vector<8x128xf32>
    %c0_3 = arith.constant 0 : index
    %c0_4 = arith.constant 0 : index
    %3 = vector.load %arg3[%c0_3, %c0_4] : memref<1x128xf32, #tpu.memory_space<vmem>>, vector<1x128xf32>
    %4 = vector.broadcast %3 : vector<1x128xf32> to vector<8x128xf32>
    %5 = arith.addf %2, %4 : vector<8x128xf32>
    %cst_5 = arith.constant 0.000000e+00 : f32
    %6 = vector.broadcast %cst_5 : f32 to vector<8x128xf32>
    %7 = arith.maximumf %5, %6 : vector<8x128xf32>
    %8 = arith.truncf %7 : vector<8x128xf32> to vector<8x128xbf16>
    %c0_6 = arith.constant 0 : index
    %c0_7 = arith.constant 0 : index
    %9 = vector.load %arg4[%c0_6, %c0_7] : memref<128x64xbf16, #tpu.memory_space<vmem>>, vector<128x64xbf16>
    %cst_8 = arith.constant dense<0.000000e+00> : vector<8x64xf32>
    %10 = tpu.matmul %8, %9, %cst_8 {dimension_numbers = #tpu.dot_dimension_numbers<[1], [0], [0], [1], [0, 0, 1, 1], [], []>} : vector<8x128xbf16>, vector<128x64xbf16>, vector<8x64xf32> -> vector<8x64xf32>
    %c0_9 = arith.constant 0 : index
    %c0_10 = arith.constant 0 : index
    %11 = vector.load %arg5[%c0_9, %c0_10] : memref<1x64xf32, #tpu.memory_space<vmem>>, vector<1x64xf32>
    %12 = vector.broadcast %11 : vector<1x64xf32> to vector<8x64xf32>
    %13 = arith.addf %10, %12 : vector<8x64xf32>
    %cst_11 = arith.constant 0.000000e+00 : f32
    %14 = vector.broadcast %cst_11 : f32 to vector<8x64xf32>
    %15 = arith.maximumf %13, %14 : vector<8x64xf32>
    %16 = arith.truncf %15 : vector<8x64xf32> to vector<8x64xbf16>
    %c0_12 = arith.constant 0 : index
    %c0_13 = arith.constant 0 : index
    %17 = vector.load %arg6[%c0_12, %c0_13] : memref<64x128xbf16, #tpu.memory_space<vmem>>, vector<64x128xbf16>
    %cst_14 = arith.constant dense<0.000000e+00> : vector<8x128xf32>
    %18 = tpu.matmul %16, %17, %cst_14 {dimension_numbers = #tpu.dot_dimension_numbers<[1], [0], [0], [1], [0, 0, 1, 1], [], []>} : vector<8x64xbf16>, vector<64x128xbf16>, vector<8x128xf32> -> vector<8x128xf32>
    %c0_15 = arith.constant 0 : index
    %c0_16 = arith.constant 0 : index
    %19 = vector.load %arg7[%c0_15, %c0_16] : memref<1x128xf32, #tpu.memory_space<vmem>>, vector<1x128xf32>
    %20 = vector.broadcast %19 : vector<1x128xf32> to vector<8x128xf32>
    %21 = arith.addf %18, %20 : vector<8x128xf32>
    %22 = arith.truncf %21 : vector<8x128xf32> to vector<8x128xbf16>
    %c0_17 = arith.constant 0 : index
    %c0_18 = arith.constant 0 : index
    %23 = vector.load %arg8[%c0_17, %c0_18] : memref<8x128xbf16, #tpu.memory_space<vmem>>, vector<8x128xbf16>
    tpu.vector_store %arg8[%c0_17, %c0_18], %22 {strides = array<i32>} : memref<8x128xbf16, #tpu.memory_space<vmem>>, vector<8x128xbf16>,
    return
  }
  func.func @transform_0(%arg0: i32) -> (i32, i32) {
    %c0_i32 = arith.constant 0 : i32
    %c0_i32_0 = arith.constant 0 : i32
    return %arg0, %c0_i32 : i32, i32
  }
  func.func @transform_1(%arg0: i32) -> (i32, i32) {
    %c0_i32 = arith.constant 0 : i32
    %c0_i32_0 = arith.constant 0 : i32
    %c0_i32_1 = arith.constant 0 : i32
    return %c0_i32, %c0_i32_0 : i32, i32
  }
  func.func @transform_2(%arg0: i32) -> (i32, i32) {
    %c0_i32 = arith.constant 0 : i32
    %c0_i32_0 = arith.constant 0 : i32
    %c0_i32_1 = arith.constant 0 : i32
    return %c0_i32, %c0_i32_0 : i32, i32
  }
  func.func @transform_3(%arg0: i32) -> (i32, i32) {
    %c0_i32 = arith.constant 0 : i32
    %c0_i32_0 = arith.constant 0 : i32
    %c0_i32_1 = arith.constant 0 : i32
    return %c0_i32, %c0_i32_0 : i32, i32
  }
  func.func @transform_4(%arg0: i32) -> (i32, i32) {
    %c0_i32 = arith.constant 0 : i32
    %c0_i32_0 = arith.constant 0 : i32
    %c0_i32_1 = arith.constant 0 : i32
    return %c0_i32, %c0_i32_0 : i32, i32
  }
  func.func @transform_5(%arg0: i32) -> (i32, i32) {
    %c0_i32 = arith.constant 0 : i32
    %c0_i32_0 = arith.constant 0 : i32
    %c0_i32_1 = arith.constant 0 : i32
    return %c0_i32, %c0_i32_0 : i32, i32
  }
  func.func @transform_6(%arg0: i32) -> (i32, i32) {
    %c0_i32 = arith.constant 0 : i32
    %c0_i32_0 = arith.constant 0 : i32
    %c0_i32_1 = arith.constant 0 : i32
    return %c0_i32, %c0_i32_0 : i32, i32
  }
  func.func @transform_7(%arg0: i32) -> (i32, i32) {
    %c0_i32 = arith.constant 0 : i32
    %c0_i32_0 = arith.constant 0 : i32
    return %arg0, %c0_i32 : i32, i32
  }
}

</mosaic_0001>

<llo_original>
// kernel: tpu_custom_call.1
$region0: #{tpu_custom_call.1}
  #allocation0 [shape = 'u32[]', space=smem, size = 0x4, offset = 0x4, fixed_abs, tag = 'smem constant byte address 0x4 - core index']
  #allocation1 [shape = 'u32[144,128]{1,0:T(1,128)}', space=vmem, size = 0x12000, scoped, tag = 'internal scratch']
  %s0 = inlined_call_operand.vmem [shape: bf16[8,784], index: 0, kind: input, shape index: {}]
  %s1 = inlined_call_operand.hbm [shape: bf16[784,128], index: 1, kind: input, shape index: {}]
  %s2 = inlined_call_operand.vmem [shape: f32[1,128], index: 2, kind: input, shape index: {}]
  %s3 = inlined_call_operand.vmem [shape: bf16[128,64], index: 3, kind: input, shape index: {}]
  %s4 = inlined_call_operand.vmem [shape: f32[1,64], index: 4, kind: input, shape index: {}]
  %s5 = inlined_call_operand.vmem [shape: bf16[64,128], index: 5, kind: input, shape index: {}]
  %s6 = inlined_call_operand.vmem [shape: f32[1,128], index: 6, kind: input, shape index: {}]
  %s7 = inlined_call_operand.hbm [shape: bf16[8,128], index: 7, kind: output, shape index: {}]
  %s8 = sld [smem:[#allocation0]]
  $region42: #{tpu_custom_call.1} parent=0
    _
  %s10 = ssub.s32 1, %s8
  %s11 = scalar_select 0, %s10, %s8
  $region1: #{tpu_custom_call.1} parent=0
    #allocation2 [shape = 'u8[200704]{0}', space=vmem, size = 0x31000, scoped, tag = 'input window, operand 1, single buffered']
    #allocation3 [shape = 's32[1]{0}', space=sflag, size = 0x4, scoped, tag = 'scoped memory for tpu_custom_call.1']
    #allocation4 [shape = 's32[1]{0}', space=sflag, size = 0x4, scoped, tag = 'scoped memory for tpu_custom_call.1']
    #allocation5 [shape = 'u8[2048]{0}', space=vmem, size = 0x800, scoped, tag = 'output window, operand 0, single buffered']
    %12 = vsyncpa [#allocation3], 0
    %13 = vsyncpa [#allocation4], 0
    // Predicated region
    $region2: #{tpu_custom_call.1} parent=1 // pred_check
      _
    $region3: #{tpu_custom_call.1} parent=1 // pred_check_branch
      %15 = sbr.rel (0) target = $region5
    $region4: #{tpu_custom_call.1} parent=1 // pred_region
      _
    $region5: #{tpu_custom_call.1} parent=1 // pred_fallthru
      _
    // Predicated region
    $region6: #{tpu_custom_call.1} parent=1 // pred_check
      _
    $region7: #{tpu_custom_call.1} parent=1 // pred_check_branch
      %17 = sbr.rel (0) target = $region9
    $region8: #{tpu_custom_call.1} parent=1 // pred_region
      %s19 = ssub.s32 6272, 6272
      %20 = vsyncadd [#allocation3], %s19
      %s21 = sshll.u32 [#allocation2], 4
      %s22 = int_to_ptr.vmem [resolvable:$true] %s21
      %27 = dma.hbm_to_vmem [thread:$0]  %s1, 6272, %s22, [#allocation3], 64, 64, 4
    $region9: #{tpu_custom_call.1} parent=1 // pred_fallthru
      _
    // Predicated region
    $region10: #{tpu_custom_call.1} parent=1 // pred_check
      _
    $region11: #{tpu_custom_call.1} parent=1 // pred_check_branch
      %29 = sbr.rel (0) target = $region13
    $region12: #{tpu_custom_call.1} parent=1 // pred_region
      _
    $region13: #{tpu_custom_call.1} parent=1 // pred_fallthru
      _
    // Predicated region
    $region14: #{tpu_custom_call.1} parent=1 // pred_check
      _
    $region15: #{tpu_custom_call.1} parent=1 // pred_check_branch
      %31 = sbr.rel (0) target = $region17
    $region16: #{tpu_custom_call.1} parent=1 // pred_region
      _
    $region17: #{tpu_custom_call.1} parent=1 // pred_fallthru
      _
    // Predicated region
    $region18: #{tpu_custom_call.1} parent=1 // pred_check
      _
    $region19: #{tpu_custom_call.1} parent=1 // pred_check_branch
      %33 = sbr.rel (0) target = $region21
    $region20: #{tpu_custom_call.1} parent=1 // pred_region
      _
    $region21: #{tpu_custom_call.1} parent=1 // pred_fallthru
      _
    // Predicated region
    $region22: #{tpu_custom_call.1} parent=1 // pred_check
      _
    $region23: #{tpu_custom_call.1} parent=1 // pred_check_branch
      %35 = sbr.rel (0) target = $region25
    $region24: #{tpu_custom_call.1} parent=1 // pred_region
      _
    $region25: #{tpu_custom_call.1} parent=1 // pred_fallthru
      _
    // Predicated region
    $region26: #{tpu_custom_call.1} parent=1 // pred_check
      _
    $region27: #{tpu_custom_call.1} parent=1 // pred_check_branch
      %37 = sbr.rel (0) target = $region29
    $region28: #{tpu_custom_call.1} parent=1 // pred_region
      _
    $region29: #{tpu_custom_call.1} parent=1 // pred_fallthru
      _
    // Predicated region
    $region30: #{tpu_custom_call.1} parent=1 // pred_check
      _
    $region31: #{tpu_custom_call.1} parent=1 // pred_check_branch
      %39 = sbr.rel (0) target = $region33
    $region32: #{tpu_custom_call.1} parent=1 // pred_region
      %40 = dma.done [#allocation3], 6272
    $region33: #{tpu_custom_call.1} parent=1 // pred_fallthru
      _
    %v42 = vld [vmem:[%s0] sm:$0xff]
    %v43 = vld [vmem:[%s0 + $0x8] sm:$0xff]
    %v44 = vld [vmem:[%s0 + $0x10] sm:$0xff]
    %v45 = vld [vmem:[%s0 + $0x18] sm:$0xf]
    %v46 = vld [vmem:[#allocation2] sm:$0xf]
    %v47 = vld [vmem:[#allocation2 + $0x4] sm:$0xf]
    %v48 = vld [vmem:[#allocation2 + $0x8] sm:$0xf]
    %v49 = vld [vmem:[#allocation2 + $0xc] sm:$0xf]
    %v50 = vld [vmem:[#allocation2 + $0x10] sm:$0xf]
    %v51 = vld [vmem:[#allocation2 + $0x14] sm:$0xf]
    %v52 = vld [vmem:[#allocation2 + $0x18] sm:$0xf]
    %v53 = vld [vmem:[#allocation2 + $0x1c] sm:$0xf]
    %v54 = vld [vmem:[#allocation2 + $0x20] sm:$0xf]
    %v55 = vld [vmem:[#allocation2 + $0x24] sm:$0xf]
    %v56 = vld [vmem:[#allocation2 + $0x28] sm:$0xf]
    %v57 = vld [vmem:[#allocation2 + $0x2c] sm:$0xf]
    %v58 = vld [vmem:[#allocation2 + $0x30] sm:$0xf]
    %v59 = vld [vmem:[#allocation2 + $0x34] sm:$0xf]
    %v60 = vld [vmem:[#allocation2 + $0x38] sm:$0xf]
    %v61 = vld [vmem:[#allocation2 + $0x3c] sm:$0xf]
    %v62 = vld [vmem:[#allocation2 + $0x40] sm:$0xf]
    %v63 = vld [vmem:[#allocation2 + $0x44] sm:$0xf]
    %v64 = vld [vmem:[#allocation2 + $0x48] sm:$0xf]
    %v65 = vld [vmem:[#allocation2 + $0x4c] sm:$0xf]
    %v66 = vld [vmem:[#allocation2 + $0x50] sm:$0xf]
    %v67 = vld [vmem:[#allocation2 + $0x54] sm:$0xf]
    %v68 = vld [vmem:[#allocation2 + $0x58] sm:$0xf]
    %v69 = vld [vmem:[#allocation2 + $0x5c] sm:$0xf]
    %v70 = vld [vmem:[#allocation2 + $0x60] sm:$0xf]
    %v71 = vld [vmem:[#allocation2 + $0x64] sm:$0xf]
    %v72 = vld [vmem:[#allocation2 + $0x68] sm:$0xf]
    %v73 = vld [vmem:[#allocation2 + $0x6c] sm:$0xf]
    %v74 = vld [vmem:[#allocation2 + $0x70] sm:$0xf]
    %v75 = vld [vmem:[#allocation2 + $0x74] sm:$0xf]
    %v76 = vld [vmem:[#allocation2 + $0x78] sm:$0xf]
    %v77 = vld [vmem:[#allocation2 + $0x7c] sm:$0xf]
    %v78 = vld [vmem:[#allocation2 + $0x80] sm:$0xf]
    %v79 = vld [vmem:[#allocation2 + $0x84] sm:$0xf]
    %v80 = vld [vmem:[#allocation2 + $0x88] sm:$0xf]
    %v81 = vld [vmem:[#allocation2 + $0x8c] sm:$0xf]
    %v82 = vld [vmem:[#allocation2 + $0x90] sm:$0xf]
    %v83 = vld [vmem:[#allocation2 + $0x94] sm:$0xf]
    %v84 = vld [vmem:[#allocation2 + $0x98] sm:$0xf]
    %v85 = vld [vmem:[#allocation2 + $0x9c] sm:$0xf]
    %v86 = vld [vmem:[#allocation2 + $0xa0] sm:$0xf]
    %v87 = vld [vmem:[#allocation2 + $0xa4] sm:$0xf]
    %v88 = vld [vmem:[#allocation2 + $0xa8] sm:$0xf]
    %v89 = vld [vmem:[#allocation2 + $0xac] sm:$0xf]
    %v90 = vld [vmem:[#allocation2 + $0xb0] sm:$0xf]
    %v91 = vld [vmem:[#allocation2 + $0xb4] sm:$0xf]
    %v92 = vld [vmem:[#allocation2 + $0xb8] sm:$0xf]
    %v93 = vld [vmem:[#allocation2 + $0xbc] sm:$0xf]
    %v94 = vld [vmem:[#allocation2 + $0xc0] sm:$0xf]
    %v95 = vld [vmem:[#allocation2 + $0xc4] sm:$0xf]
    %v96 = vld [vmem:[#allocation2 + $0xc8] sm:$0xf]
    %v97 = vld [vmem:[#allocation2 + $0xcc] sm:$0xf]
    %v98 = vld [vmem:[#allocation2 + $0xd0] sm:$0xf]
    %v99 = vld [vmem:[#allocation2 + $0xd4] sm:$0xf]
    %v100 = vld [vmem:[#allocation2 + $0xd8] sm:$0xf]
    %v101 = vld [vmem:[#allocation2 + $0xdc] sm:$0xf]
    %v102 = vld [vmem:[#allocation2 + $0xe0] sm:$0xf]
    %v103 = vld [vmem:[#allocation2 + $0xe4] sm:$0xf]
    %v104 = vld [vmem:[#allocation2 + $0xe8] sm:$0xf]
    %v105 = vld [vmem:[#allocation2 + $0xec] sm:$0xf]
    %v106 = vld [vmem:[#allocation2 + $0xf0] sm:$0xf]
    %v107 = vld [vmem:[#allocation2 + $0xf4] sm:$0xf]
    %v108 = vld [vmem:[#allocation2 + $0xf8] sm:$0xf]
    %v109 = vld [vmem:[#allocation2 + $0xfc] sm:$0xf]
    %v110 = vld [vmem:[#allocation2 + $0x100] sm:$0xf]
    %v111 = vld [vmem:[#allocation2 + $0x104] sm:$0xf]
    %v112 = vld [vmem:[#allocation2 + $0x108] sm:$0xf]
    %v113 = vld [vmem:[#allocation2 + $0x10c] sm:$0xf]
    %v114 = vld [vmem:[#allocation2 + $0x110] sm:$0xf]
    %v115 = vld [vmem:[#allocation2 + $0x114] sm:$0xf]
    %v116 = vld [vmem:[#allocation2 + $0x118] sm:$0xf]
    %v117 = vld [vmem:[#allocation2 + $0x11c] sm:$0xf]
    %v118 = vld [vmem:[#allocation2 + $0x120] sm:$0xf]
    %v119 = vld [vmem:[#allocation2 + $0x124] sm:$0xf]
    %v120 = vld [vmem:[#allocation2 + $0x128] sm:$0xf]
    %v121 = vld [vmem:[#allocation2 + $0x12c] sm:$0xf]
    %v122 = vld [vmem:[#allocation2 + $0x130] sm:$0xf]
    %v123 = vld [vmem:[#allocation2 + $0x134] sm:$0xf]
    %v124 = vld [vmem:[#allocation2 + $0x138] sm:$0xf]
    %v125 = vld [vmem:[#allocation2 + $0x13c] sm:$0xf]
    %v126 = vld [vmem:[#allocation2 + $0x140] sm:$0xf]
    %v127 = vld [vmem:[#allocation2 + $0x144] sm:$0xf]
    %v128 = vld [vmem:[#allocation2 + $0x148] sm:$0xf]
    %v129 = vld [vmem:[#allocation2 + $0x14c] sm:$0xf]
    %v130 = vld [vmem:[#allocation2 + $0x150] sm:$0xf]
    %v131 = vld [vmem:[#allocation2 + $0x154] sm:$0xf]
    %v132 = vld [vmem:[#allocation2 + $0x158] sm:$0xf]
    %v133 = vld [vmem:[#allocation2 + $0x15c] sm:$0xf]
    %v134 = vld [vmem:[#allocation2 + $0x160] sm:$0xf]
    %v135 = vld [vmem:[#allocation2 + $0x164] sm:$0xf]
    %v136 = vld [vmem:[#allocation2 + $0x168] sm:$0xf]
    %v137 = vld [vmem:[#allocation2 + $0x16c] sm:$0xf]
    %v138 = vld [vmem:[#allocation2 + $0x170] sm:$0xf]
    %v139 = vld [vmem:[#allocation2 + $0x174] sm:$0xf]
    %v140 = vld [vmem:[#allocation2 + $0x178] sm:$0xf]
    %v141 = vld [vmem:[#allocation2 + $0x17c] sm:$0xf]
    %v142 = vld [vmem:[#allocation2 + $0x180] sm:$0xf]
    %v143 = vld [vmem:[#allocation2 + $0x184] sm:$0xf]
    %v144 = vld [vmem:[%s2] sm:$0x1]
    %v146 = vlaneseq
    %v147 = vshrl.u32 %v146, 7
    %v148 = vsub.s32 0, %v147
    %v149 = vrot.slane %v144, %v148
    %v155 = vunpack.c.l.b16 %v42
    %v156 = vunpack.c.h.b16 %v42
    %v157 = vunpack.c.l.b16 %v43
    %v158 = vunpack.c.h.b16 %v43
    %v159 = vunpack.c.l.b16 %v44
    %v160 = vunpack.c.h.b16 %v44
    %v161 = vunpack.c.l.b16 %v45
    %v162 = vpack.c.b16 %v155, %v155
    %v163 = vpack.c.b16 %v156, %v156
    %v164 = vpack.c.b16 %v157, %v157
    %v165 = vpack.c.b16 %v158, %v158
    %v166 = vpack.c.b16 %v159, %v159
    %v167 = vpack.c.b16 %v160, %v160
    %v168 = vpack.c.b16 %v161, %v161
    %v273 = vunpack.c.l.b16 %v46
    %v274 = vunpack.c.l.b16 %v47
    %v275 = vunpack.c.l.b16 %v48
    %v276 = vunpack.c.l.b16 %v49
    %v277 = vunpack.c.l.b16 %v50
    %v278 = vunpack.c.l.b16 %v51
    %v279 = vunpack.c.l.b16 %v52
    %v280 = vunpack.c.l.b16 %v53
    %v281 = vunpack.c.l.b16 %v54
    %v282 = vunpack.c.l.b16 %v55
    %v283 = vunpack.c.l.b16 %v56
    %v284 = vunpack.c.l.b16 %v57
    %v285 = vunpack.c.l.b16 %v58
    %v286 = vunpack.c.l.b16 %v59
    %v287 = vunpack.c.l.b16 %v60
    %v288 = vunpack.c.l.b16 %v61
    %v289 = vunpack.c.l.b16 %v62
    %v290 = vunpack.c.l.b16 %v63
    %v291 = vunpack.c.l.b16 %v64
    %v292 = vunpack.c.l.b16 %v65
    %v293 = vunpack.c.l.b16 %v66
    %v294 = vunpack.c.l.b16 %v67
    %v295 = vunpack.c.l.b16 %v68
    %v296 = vunpack.c.l.b16 %v69
    %v297 = vunpack.c.l.b16 %v70
    %v298 = vunpack.c.l.b16 %v71
    %v299 = vunpack.c.l.b16 %v72
    %v300 = vunpack.c.l.b16 %v73
    %v301 = vunpack.c.l.b16 %v74
    %v302 = vunpack.c.l.b16 %v75
    %v303 = vunpack.c.l.b16 %v76
    %v304 = vunpack.c.l.b16 %v77
    %v305 = vunpack.c.l.b16 %v78
    %v306 = vunpack.c.l.b16 %v79
    %v307 = vunpack.c.l.b16 %v80
    %v308 = vunpack.c.l.b16 %v81
    %v309 = vunpack.c.l.b16 %v82
    %v310 = vunpack.c.l.b16 %v83
    %v311 = vunpack.c.l.b16 %v84
    %v312 = vunpack.c.l.b16 %v85
    %v313 = vunpack.c.l.b16 %v86
    %v314 = vunpack.c.l.b16 %v87
    %v315 = vunpack.c.l.b16 %v88
    %v316 = vunpack.c.l.b16 %v89
    %v317 = vunpack.c.l.b16 %v90
    %v318 = vunpack.c.l.b16 %v91
    %v319 = vunpack.c.l.b16 %v92
    %v320 = vunpack.c.l.b16 %v93
    %v321 = vunpack.c.l.b16 %v94
    %v322 = vunpack.c.l.b16 %v95
    %v323 = vunpack.c.l.b16 %v96
    %v324 = vunpack.c.l.b16 %v97
    %v325 = vunpack.c.l.b16 %v98
    %v326 = vunpack.c.l.b16 %v99
    %v327 = vunpack.c.l.b16 %v100
    %v328 = vunpack.c.l.b16 %v101
    %v329 = vunpack.c.l.b16 %v102
    %v330 = vunpack.c.l.b16 %v103
    %v331 = vunpack.c.l.b16 %v104
    %v332 = vunpack.c.l.b16 %v105
    %v333 = vunpack.c.l.b16 %v106
    %v334 = vunpack.c.l.b16 %v107
    %v335 = vunpack.c.l.b16 %v108
    %v336 = vunpack.c.l.b16 %v109
    %v337 = vunpack.c.l.b16 %v110
    %v338 = vunpack.c.l.b16 %v111
    %v339 = vunpack.c.l.b16 %v112
    %v340 = vunpack.c.l.b16 %v113
    %v341 = vunpack.c.l.b16 %v114
    %v342 = vunpack.c.l.b16 %v115
    %v343 = vunpack.c.l.b16 %v116
    %v344 = vunpack.c.l.b16 %v117
    %v345 = vunpack.c.l.b16 %v118
    %v346 = vunpack.c.l.b16 %v119
    %v347 = vunpack.c.l.b16 %v120
    %v348 = vunpack.c.l.b16 %v121
    %v349 = vunpack.c.l.b16 %v122
    %v350 = vunpack.c.l.b16 %v123
    %v351 = vunpack.c.l.b16 %v124
    %v352 = vunpack.c.l.b16 %v125
    %v353 = vunpack.c.l.b16 %v126
    %v354 = vunpack.c.l.b16 %v127
    %v355 = vunpack.c.l.b16 %v128
    %v356 = vunpack.c.l.b16 %v129
    %v357 = vunpack.c.l.b16 %v130
    %v358 = vunpack.c.l.b16 %v131
    %v359 = vunpack.c.l.b16 %v132
    %v360 = vunpack.c.l.b16 %v133
    %v361 = vunpack.c.l.b16 %v134
    %v362 = vunpack.c.l.b16 %v135
    %v363 = vunpack.c.l.b16 %v136
    %v364 = vunpack.c.l.b16 %v137
    %v365 = vunpack.c.l.b16 %v138
    %v366 = vunpack.c.l.b16 %v139
    %v367 = vunpack.c.l.b16 %v140
    %v368 = vunpack.c.l.b16 %v141
    %v369 = vunpack.c.l.b16 %v142
    %v370 = vunpack.c.l.b16 %v143
    %v371 = vpack.c.b16 %v274, %v273
    %v372 = vpack.c.b16 %v276, %v275
    %v373 = vpack.c.b16 %v278, %v277
    %v374 = vpack.c.b16 %v280, %v279
    %v375 = vpack.c.b16 %v282, %v281
    %v376 = vpack.c.b16 %v284, %v283
    %v377 = vpack.c.b16 %v286, %v285
    %v378 = vpack.c.b16 %v288, %v287
    %v379 = vpack.c.b16 %v290, %v289
    %v380 = vpack.c.b16 %v292, %v291
    %v381 = vpack.c.b16 %v294, %v293
    %v382 = vpack.c.b16 %v296, %v295
    %v383 = vpack.c.b16 %v298, %v297
    %v384 = vpack.c.b16 %v300, %v299
    %v385 = vpack.c.b16 %v302, %v301
    %v386 = vpack.c.b16 %v304, %v303
    %v387 = vpack.c.b16 %v306, %v305
    %v388 = vpack.c.b16 %v308, %v307
    %v389 = vpack.c.b16 %v310, %v309
    %v390 = vpack.c.b16 %v312, %v311
    %v391 = vpack.c.b16 %v314, %v313
    %v392 = vpack.c.b16 %v316, %v315
    %v393 = vpack.c.b16 %v318, %v317
    %v394 = vpack.c.b16 %v320, %v319
    %v395 = vpack.c.b16 %v322, %v321
    %v396 = vpack.c.b16 %v324, %v323
    %v397 = vpack.c.b16 %v326, %v325
    %v398 = vpack.c.b16 %v328, %v327
    %v399 = vpack.c.b16 %v330, %v329
    %v400 = vpack.c.b16 %v332, %v331
    %v401 = vpack.c.b16 %v334, %v333
    %v402 = vpack.c.b16 %v336, %v335
    %v403 = vpack.c.b16 %v338, %v337
    %v404 = vpack.c.b16 %v340, %v339
    %v405 = vpack.c.b16 %v342, %v341
    %v406 = vpack.c.b16 %v344, %v343
    %v407 = vpack.c.b16 %v346, %v345
    %v408 = vpack.c.b16 %v348, %v347
    %v409 = vpack.c.b16 %v350, %v349
    %v410 = vpack.c.b16 %v352, %v351
    %v411 = vpack.c.b16 %v354, %v353
    %v412 = vpack.c.b16 %v356, %v355
    %v413 = vpack.c.b16 %v358, %v357
    %v414 = vpack.c.b16 %v360, %v359
    %v415 = vpack.c.b16 %v362, %v361
    %v416 = vpack.c.b16 %v364, %v363
    %v417 = vpack.c.b16 %v366, %v365
    %v418 = vpack.c.b16 %v368, %v367
    %v419 = vpack.c.b16 %v370, %v369
    %vm469 = vcmask 130048
    %v471 = vsel %vm469, %v168, 0
    %473 = vmatprep.subr.bf16.mxu0 0
    %474 = vmatpush1.bf16.msra.mxu0 %v371
    %475 = vmatprep.subr.bf16.mxu0 0
    %476 = vmatpush1.bf16.msra.mxu0 %v372
    %477 = vmatprep.subr.bf16.mxu0 0
    %478 = vmatpush1.bf16.msra.mxu0 %v373
    %479 = vmatprep.subr.bf16.mxu0 0
    %480 = vmatpush1.bf16.msra.mxu0 %v374
    %481 = vmatprep.subr.bf16.mxu0 0
    %482 = vmatpush1.bf16.msra.mxu0 %v375
    %483 = vmatprep.subr.bf16.mxu0 0
    %484 = vmatpush1.bf16.msra.mxu0 %v376
    %485 = vmatprep.subr.bf16.mxu0 0
    %486 = vmatpush1.bf16.msra.mxu0 %v377
    %487 = vmatprep.subr.bf16.mxu0 0
    %488 = vmatpush1.bf16.msra.mxu0 %v378
    %489 = vmatprep.subr.bf16.mxu0 0
    %490 = vmatpush1.bf16.msra.mxu0 %v379
    %491 = vmatprep.subr.bf16.mxu0 0
    %492 = vmatpush1.bf16.msra.mxu0 %v380
    %493 = vmatprep.subr.bf16.mxu0 0
    %494 = vmatpush1.bf16.msra.mxu0 %v381
    %495 = vmatprep.subr.bf16.mxu0 0
    %496 = vmatpush1.bf16.msra.mxu0 %v382
    %497 = vmatprep.subr.bf16.mxu0 0
    %498 = vmatpush1.bf16.msra.mxu0 %v383
    %499 = vmatprep.subr.bf16.mxu0 0
    %500 = vmatpush1.bf16.msra.mxu0 %v384
    %501 = vmatprep.subr.bf16.mxu0 0
    %502 = vmatpush1.bf16.msra.mxu0 %v385
    %503 = vmatprep.subr.bf16.mxu0 0
    %504 = vmatpush1.bf16.msra.mxu0 %v386
    %505 = vmatprep.mubr.bf16.mxu0 %v163
    %506 = vmatmul.mubr.bf16.gmra.mrb[0].mxu0 %v162
    %v507 = vpop.f32.mrb[0].mxu0
    %v508 = vadd.f32 %v149, %v507
    %v509 = vpop.f32.mrb[0].mxu0
    %v510 = vpop.f32.mrb[0].mxu0
    %v511 = vpop.f32.mrb[0].mxu0
    %512 = vdwg.mxu0
    %513 = vmatprep.subr.bf16.mxu0 0
    %514 = vmatpush1.bf16.msra.mxu0 %v387
    %515 = vmatprep.subr.bf16.mxu0 0
    %516 = vmatpush1.bf16.msra.mxu0 %v388
    %517 = vmatprep.subr.bf16.mxu0 0
    %518 = vmatpush1.bf16.msra.mxu0 %v389
    %519 = vmatprep.subr.bf16.mxu0 0
    %520 = vmatpush1.bf16.msra.mxu0 %v390
    %521 = vmatprep.subr.bf16.mxu0 0
    %522 = vmatpush1.bf16.msra.mxu0 %v391
    %523 = vmatprep.subr.bf16.mxu0 0
    %524 = vmatpush1.bf16.msra.mxu0 %v392
    %525 = vmatprep.subr.bf16.mxu0 0
    %526 = vmatpush1.bf16.msra.mxu0 %v393
    %527 = vmatprep.subr.bf16.mxu0 0
    %528 = vmatpush1.bf16.msra.mxu0 %v394
    %529 = vmatprep.subr.bf16.mxu0 0
    %530 = vmatpush1.bf16.msra.mxu0 %v395
    %531 = vmatprep.subr.bf16.mxu0 0
    %532 = vmatpush1.bf16.msra.mxu0 %v396
    %533 = vmatprep.subr.bf16.mxu0 0
    %534 = vmatpush1.bf16.msra.mxu0 %v397
    %535 = vmatprep.subr.bf16.mxu0 0
    %536 = vmatpush1.bf16.msra.mxu0 %v398
    %537 = vmatprep.subr.bf16.mxu0 0
    %538 = vmatpush1.bf16.msra.mxu0 %v399
    %539 = vmatprep.subr.bf16.mxu0 0
    %540 = vmatpush1.bf16.msra.mxu0 %v400
    %541 = vmatprep.subr.bf16.mxu0 0
    %542 = vmatpush1.bf16.msra.mxu0 %v401
    %543 = vmatprep.subr.bf16.mxu0 0
    %544 = vmatpush1.bf16.msra.mxu0 %v402
    %545 = vmatprep.mubr.bf16.mxu0 %v165
    %546 = vmatmul.mubr.bf16.gmra.mrb[0].mxu0 %v164
    %v547 = vpop.f32.mrb[0].mxu0
    %v548 = vadd.f32 %v508, %v547
    %v549 = vpop.f32.mrb[0].mxu0
    %v550 = vpop.f32.mrb[0].mxu0
    %v551 = vpop.f32.mrb[0].mxu0
    %552 = vdwg.mxu0
    %553 = vmatprep.subr.bf16.mxu0 0
    %554 = vmatpush1.bf16.msra.mxu0 %v403
    %555 = vmatprep.subr.bf16.mxu0 0
    %556 = vmatpush1.bf16.msra.mxu0 %v404
    %557 = vmatprep.subr.bf16.mxu0 0
    %558 = vmatpush1.bf16.msra.mxu0 %v405
    %559 = vmatprep.subr.bf16.mxu0 0
    %560 = vmatpush1.bf16.msra.mxu0 %v406
    %561 = vmatprep.subr.bf16.mxu0 0
    %562 = vmatpush1.bf16.msra.mxu0 %v407
    %563 = vmatprep.subr.bf16.mxu0 0
    %564 = vmatpush1.bf16.msra.mxu0 %v408
    %565 = vmatprep.subr.bf16.mxu0 0
    %566 = vmatpush1.bf16.msra.mxu0 %v409
    %567 = vmatprep.subr.bf16.mxu0 0
    %568 = vmatpush1.bf16.msra.mxu0 %v410
    %569 = vmatprep.subr.bf16.mxu0 0
    %570 = vmatpush1.bf16.msra.mxu0 %v411
    %571 = vmatprep.subr.bf16.mxu0 0
    %572 = vmatpush1.bf16.msra.mxu0 %v412
    %573 = vmatprep.subr.bf16.mxu0 0
    %574 = vmatpush1.bf16.msra.mxu0 %v413
    %575 = vmatprep.subr.bf16.mxu0 0
    %576 = vmatpush1.bf16.msra.mxu0 %v414
    %577 = vmatprep.subr.bf16.mxu0 0
    %578 = vmatpush1.bf16.msra.mxu0 %v415
    %579 = vmatprep.subr.bf16.mxu0 0
    %580 = vmatpush1.bf16.msra.mxu0 %v416
    %581 = vmatprep.subr.bf16.mxu0 0
    %582 = vmatpush1.bf16.msra.mxu0 %v417
    %583 = vmatprep.subr.bf16.mxu0 0
    %584 = vmatpush1.bf16.msra.mxu0 %v418
    %585 = vmatprep.mubr.bf16.mxu0 %v167
    %586 = vmatmul.mubr.bf16.gmra.mrb[0].mxu0 %v166
    %v587 = vpop.f32.mrb[0].mxu0
    %v588 = vadd.f32 %v548, %v587
    %v589 = vpop.f32.mrb[0].mxu0
    %v590 = vpop.f32.mrb[0].mxu0
    %v591 = vpop.f32.mrb[0].mxu0
    %592 = vdwg.mxu0
    %593 = vmatprep.subr.bf16.mxu0 0
    %594 = vmatpush1.bf16.msra.mxu0 %v419
    %595 = vmatprep.subr.bf16.mxu0 0
    %596 = vmatpush1.bf16.msra.mxu0 0
    %597 = vmatprep.subr.bf16.mxu0 0
    %598 = vmatpush1.bf16.msra.mxu0 0
    %599 = vmatprep.subr.bf16.mxu0 0
    %600 = vmatpush1.bf16.msra.mxu0 0
    %601 = vmatprep.subr.bf16.mxu0 0
    %602 = vmatpush1.bf16.msra.mxu0 0
    %603 = vmatprep.subr.bf16.mxu0 0
    %604 = vmatpush1.bf16.msra.mxu0 0
    %605 = vmatprep.subr.bf16.mxu0 0
    %606 = vmatpush1.bf16.msra.mxu0 0
    %607 = vmatprep.subr.bf16.mxu0 0
    %608 = vmatpush1.bf16.msra.mxu0 0
    %609 = vmatprep.subr.bf16.mxu0 0
    %610 = vmatpush1.bf16.msra.mxu0 0
    %611 = vmatprep.subr.bf16.mxu0 0
    %612 = vmatpush1.bf16.msra.mxu0 0
    %613 = vmatprep.subr.bf16.mxu0 0
    %614 = vmatpush1.bf16.msra.mxu0 0
    %615 = vmatprep.subr.bf16.mxu0 0
    %616 = vmatpush1.bf16.msra.mxu0 0
    %617 = vmatprep.subr.bf16.mxu0 0
    %618 = vmatpush1.bf16.msra.mxu0 0
    %619 = vmatprep.subr.bf16.mxu0 0
    %620 = vmatpush1.bf16.msra.mxu0 0
    %621 = vmatprep.subr.bf16.mxu0 0
    %622 = vmatpush1.bf16.msra.mxu0 0
    %623 = vmatprep.subr.bf16.mxu0 0
    %624 = vmatpush1.bf16.msra.mxu0 0
    %625 = vmatprep.mubr.bf16.mxu0 0
    %626 = vmatmul.mubr.bf16.gmra.mrb[0].mxu0 %v471
    %v627 = vpop.f32.mrb[0].mxu0
    %v628 = vadd.f32 %v588, %v627
    %v629 = vpop.f32.mrb[0].mxu0
    %v630 = vpop.f32.mrb[0].mxu0
    %v631 = vpop.f32.mrb[0].mxu0
    %632 = vdwg.mxu0
    %v633 = vmax.f32 %v628, 0.0
    %v634 = vpack.c.bf16 %v633, %v633
    %v635 = vld [vmem:[%s3] sm:$0xf]
    %v636 = vld [vmem:[%s3 + $0x4] sm:$0xf]
    %v637 = vld [vmem:[%s3 + $0x8] sm:$0xf]
    %v638 = vld [vmem:[%s3 + $0xc] sm:$0xf]
    %v639 = vld [vmem:[%s3 + $0x10] sm:$0xf]
    %v640 = vld [vmem:[%s3 + $0x14] sm:$0xf]
    %v641 = vld [vmem:[%s3 + $0x18] sm:$0xf]
    %v642 = vld [vmem:[%s3 + $0x1c] sm:$0xf]
    %v643 = vld [vmem:[%s3 + $0x20] sm:$0xf]
    %v644 = vld [vmem:[%s3 + $0x24] sm:$0xf]
    %v645 = vld [vmem:[%s3 + $0x28] sm:$0xf]
    %v646 = vld [vmem:[%s3 + $0x2c] sm:$0xf]
    %v647 = vld [vmem:[%s3 + $0x30] sm:$0xf]
    %v648 = vld [vmem:[%s3 + $0x34] sm:$0xf]
    %v649 = vld [vmem:[%s3 + $0x38] sm:$0xf]
    %v650 = vld [vmem:[%s3 + $0x3c] sm:$0xf]
    %v651 = vld [vmem:[%s4] sm:$0x1]
    %v653 = vlaneseq
    %v654 = vshrl.u32 %v653, 7
    %v655 = vsub.s32 0, %v654
    %v656 = vrot.slane %v651, %v655
    %v674 = vunpack.c.l.b16 %v635
    %v675 = vunpack.c.l.b16 %v636
    %v676 = vunpack.c.l.b16 %v637
    %v677 = vunpack.c.l.b16 %v638
    %v678 = vunpack.c.l.b16 %v639
    %v679 = vunpack.c.l.b16 %v640
    %v680 = vunpack.c.l.b16 %v641
    %v681 = vunpack.c.l.b16 %v642
    %v682 = vunpack.c.l.b16 %v643
    %v683 = vunpack.c.l.b16 %v644
    %v684 = vunpack.c.l.b16 %v645
    %v685 = vunpack.c.l.b16 %v646
    %v686 = vunpack.c.l.b16 %v647
    %v687 = vunpack.c.l.b16 %v648
    %v688 = vunpack.c.l.b16 %v649
    %v689 = vunpack.c.l.b16 %v650
    %v690 = vpack.c.b16 %v675, %v674
    %v691 = vpack.c.b16 %v677, %v676
    %v692 = vpack.c.b16 %v679, %v678
    %v693 = vpack.c.b16 %v681, %v680
    %v694 = vpack.c.b16 %v683, %v682
    %v695 = vpack.c.b16 %v685, %v684
    %v696 = vpack.c.b16 %v687, %v686
    %v697 = vpack.c.b16 %v689, %v688
    %706 = vmatprep.subr.bf16.mxu0 0
    %707 = vmatpush1.bf16.msra.mxu0 %v690
    %708 = vmatprep.subr.bf16.mxu0 0
    %709 = vmatpush1.bf16.msra.mxu0 %v691
    %710 = vmatprep.subr.bf16.mxu0 0
    %711 = vmatpush1.bf16.msra.mxu0 %v692
    %712 = vmatprep.subr.bf16.mxu0 0
    %713 = vmatpush1.bf16.msra.mxu0 %v693
    %714 = vmatprep.subr.bf16.mxu0 0
    %715 = vmatpush1.bf16.msra.mxu0 %v694
    %716 = vmatprep.subr.bf16.mxu0 0
    %717 = vmatpush1.bf16.msra.mxu0 %v695
    %718 = vmatprep.subr.bf16.mxu0 0
    %719 = vmatpush1.bf16.msra.mxu0 %v696
    %720 = vmatprep.subr.bf16.mxu0 0
    %721 = vmatpush1.bf16.msra.mxu0 %v697
    %722 = vmatprep.subr.bf16.mxu0 0
    %723 = vmatpush1.bf16.msra.mxu0 0
    %724 = vmatprep.subr.bf16.mxu0 0
    %725 = vmatpush1.bf16.msra.mxu0 0
    %726 = vmatprep.subr.bf16.mxu0 0
    %727 = vmatpush1.bf16.msra.mxu0 0
    %728 = vmatprep.subr.bf16.mxu0 0
    %729 = vmatpush1.bf16.msra.mxu0 0
    %730 = vmatprep.subr.bf16.mxu0 0
    %731 = vmatpush1.bf16.msra.mxu0 0
    %732 = vmatprep.subr.bf16.mxu0 0
    %733 = vmatpush1.bf16.msra.mxu0 0
    %734 = vmatprep.subr.bf16.mxu0 0
    %735 = vmatpush1.bf16.msra.mxu0 0
    %736 = vmatprep.subr.bf16.mxu0 0
    %737 = vmatpush1.bf16.msra.mxu0 0
    %738 = vmatprep.mubr.bf16.mxu0 0
    %739 = vmatmul.mubr.bf16.gmra.mrb[0].mxu0 %v634
    %v740 = vpop.f32.mrb[0].mxu0
    %v741 = vadd.f32 %v656, %v740
    %v742 = vpop.f32.mrb[0].mxu0
    %v743 = vpop.f32.mrb[0].mxu0
    %v744 = vpop.f32.mrb[0].mxu0
    %745 = vdwg.mxu0
    %v746 = vmax.f32 %v741, 0.0
    %v747 = vpack.c.bf16 %v746, %v746
    %v748 = vld [vmem:[%s5] sm:$0xf]
    %v749 = vld [vmem:[%s5 + $0x4] sm:$0xf]
    %v750 = vld [vmem:[%s5 + $0x8] sm:$0xf]
    %v751 = vld [vmem:[%s5 + $0xc] sm:$0xf]
    %v752 = vld [vmem:[%s5 + $0x10] sm:$0xf]
    %v753 = vld [vmem:[%s5 + $0x14] sm:$0xf]
    %v754 = vld [vmem:[%s5 + $0x18] sm:$0xf]
    %v755 = vld [vmem:[%s5 + $0x1c] sm:$0xf]
    %v756 = vld [vmem:[%s6] sm:$0x1]
    %v758 = vlaneseq
    %v759 = vshrl.u32 %v758, 7
    %v760 = vsub.s32 0, %v759
    %v761 = vrot.slane %v756, %v760
    %v771 = vunpack.c.l.b16 %v748
    %v772 = vunpack.c.l.b16 %v749
    %v773 = vunpack.c.l.b16 %v750
    %v774 = vunpack.c.l.b16 %v751
    %v775 = vunpack.c.l.b16 %v752
    %v776 = vunpack.c.l.b16 %v753
    %v777 = vunpack.c.l.b16 %v754
    %v778 = vunpack.c.l.b16 %v755
    %v779 = vpack.c.b16 %v772, %v771
    %v780 = vpack.c.b16 %v774, %v773
    %v781 = vpack.c.b16 %v776, %v775
    %v782 = vpack.c.b16 %v778, %v777
    %vm787 = vcmask 523264
    %v789 = vsel %vm787, %v747, 0
    %791 = vmatprep.subr.bf16.mxu0 0
    %792 = vmatpush1.bf16.msra.mxu0 %v779
    %793 = vmatprep.subr.bf16.mxu0 0
    %794 = vmatpush1.bf16.msra.mxu0 %v780
    %795 = vmatprep.subr.bf16.mxu0 0
    %796 = vmatpush1.bf16.msra.mxu0 %v781
    %797 = vmatprep.subr.bf16.mxu0 0
    %798 = vmatpush1.bf16.msra.mxu0 %v782
    %799 = vmatprep.subr.bf16.mxu0 0
    %800 = vmatpush1.bf16.msra.mxu0 0
    %801 = vmatprep.subr.bf16.mxu0 0
    %802 = vmatpush1.bf16.msra.mxu0 0
    %803 = vmatprep.subr.bf16.mxu0 0
    %804 = vmatpush1.bf16.msra.mxu0 0
    %805 = vmatprep.subr.bf16.mxu0 0
    %806 = vmatpush1.bf16.msra.mxu0 0
    %807 = vmatprep.subr.bf16.mxu0 0
    %808 = vmatpush1.bf16.msra.mxu0 0
    %809 = vmatprep.subr.bf16.mxu0 0
    %810 = vmatpush1.bf16.msra.mxu0 0
    %811 = vmatprep.subr.bf16.mxu0 0
    %812 = vmatpush1.bf16.msra.mxu0 0
    %813 = vmatprep.subr.bf16.mxu0 0
    %814 = vmatpush1.bf16.msra.mxu0 0
    %815 = vmatprep.subr.bf16.mxu0 0
    %816 = vmatpush1.bf16.msra.mxu0 0
    %817 = vmatprep.subr.bf16.mxu0 0
    %818 = vmatpush1.bf16.msra.mxu0 0
    %819 = vmatprep.subr.bf16.mxu0 0
    %820 = vmatpush1.bf16.msra.mxu0 0
    %821 = vmatprep.subr.bf16.mxu0 0
    %822 = vmatpush1.bf16.msra.mxu0 0
    %823 = vmatprep.mubr.bf16.mxu0 0
    %824 = vmatmul.mubr.bf16.gmra.mrb[0].mxu0 %v789
    %v825 = vpop.f32.mrb[0].mxu0
    %v826 = vadd.f32 %v761, %v825
    %v827 = vpop.f32.mrb[0].mxu0
    %v828 = vpop.f32.mrb[0].mxu0
    %v829 = vpop.f32.mrb[0].mxu0
    %830 = vdwg.mxu0
    %v831 = vpack.c.bf16 %v826, %v826
    %832 = vst [vmem:[#allocation5] sm:$0xf] %v831
    // Predicated region
    $region34: #{tpu_custom_call.1} parent=1 // pred_check
      _
    $region35: #{tpu_custom_call.1} parent=1 // pred_check_branch
      %834 = sbr.rel (0) target = $region37
    $region36: #{tpu_custom_call.1} parent=1 // pred_region
      %s836 = ssub.s32 64, 64
      %837 = vsyncadd [#allocation4], %s836
      %s839 = sshll.u32 [#allocation5], 4
      %s840 = int_to_ptr.vmem [resolvable:$true] %s839
      %842 = dma.vmem_to_hbm [thread:$0]  %s840, 64, %s7, [#allocation4]
    $region37: #{tpu_custom_call.1} parent=1 // pred_fallthru
      _
    // Predicated region
    $region38: #{tpu_custom_call.1} parent=1 // pred_check
      _
    $region39: #{tpu_custom_call.1} parent=1 // pred_check_branch
      %844 = sbr.rel (0) target = $region41
    $region40: #{tpu_custom_call.1} parent=1 // pred_region
      %845 = dma.done [#allocation4], 64
    $region41: #{tpu_custom_call.1} parent=1 // pred_fallthru
      _
    %846 = vsyncpa [#allocation3], 1
    %847 = vsyncpa [#allocation4], 1

</llo_original>
